<compile_context>
chip_gen: v6e
topology: v6e:2x2x1
jax: 0.10.0
libtpu: 0.0.40
codegen_flags: <defaults>
</compile_context>

<pallas_src>
import jax
import jax.numpy as jnp
from jax import lax
from jax.experimental import pallas as pl
from jax.experimental.pallas import tpu as pltpu

FILTER_SIZES = (2, 4, 6, 8, 10)


def _round_up(x, m):
    return (x + m - 1) // m * m


def _make_kernel(filter_sizes, num_filters):
    F = num_filters

    def kernel(x_ref, w_all_ref, bias_ref, clf_w_ref, clf_b_ref, out_ref, feat_ref):
        # x_ref:     (TB, L, H)          native dtype
        # w_all_ref: (H, NCpad)          fused conv taps, lane-padded
        # bias_ref:  (1, FEATpad) f32    fused conv biases, lane-padded
        # clf_w_ref: (FEATpad, Cpad) f32 classifier weight (padded rows/cols = 0)
        # clf_b_ref: (1, Cpad) f32
        # out_ref:   (TB, Cpad) f32
        # feat_ref:  VMEM scratch (TB, FEATpad) f32
        x = x_ref[...]                                   # keep native dtype
        tb, L, _ = x.shape

        # Single fused MXU matmul over ALL conv taps of ALL filter sizes.
        y = lax.dot_general(
            x, w_all_ref[...],
            dimension_numbers=(((2,), (0,)), ((), ())),
            preferred_element_type=jnp.float32)          # (TB, L, NCpad) f32

        # Zero once so the padded feature lanes are well-defined.
        feat_ref[...] = jnp.zeros_like(feat_ref)

        col = 0
        for k, fs in enumerate(filter_sizes):
            T = L - fs + 1                               # valid conv positions
            # Conv along seq == shifted adds of Y column blocks (VPU only).
            acc = y[:, 0:T, col:col + F]                 # init from tap 0
            for i in range(1, fs):
                acc = acc + y[:, i:i + T, col + i * F: col + (i + 1) * F]
            col += fs * F
            # Global max-pool over the (full valid) sequence length.
            feat_ref[:, k * F:(k + 1) * F] = jnp.max(acc, axis=1)   # (TB, F)

        # Bias + ReLU moved AFTER the max-pool (both commute with max over t).
        feat = jnp.maximum(feat_ref[...] + bias_ref[...], 0.0)      # (TB, FEATpad)

        logits = jnp.dot(feat, clf_w_ref[...],
                         preferred_element_type=jnp.float32) + clf_b_ref[...]
        out_ref[...] = logits.astype(out_ref.dtype)

    return kernel


def deberta_cnn_classifier(sequence_output, conv_weights, conv_biases,
                           clf_w, clf_b, *, batch_tile=None):
    """sequence_output: (B, L, H).  conv_weights[k]: (fs_k, H, F) (PyTorch OIHW
    (F,1,fs,H) transposed), conv_biases[k]: (1, F), clf_w: (5F, C), clf_b: (1, C)."""
    B, L, H = sequence_output.shape
    filter_sizes = tuple(int(w.shape[0]) for w in conv_weights)
    F = int(conv_weights[0].shape[-1])
    num_labels = int(clf_b.shape[-1])
    assert L >= max(filter_sizes), "sequence length must cover the largest filter"

    NC = sum(filter_sizes) * F                 # fused conv output columns
    NCpad = _round_up(NC, 128)                 # lane-dense matmul N
    FEAT = len(filter_sizes) * F               # concatenated pooled features
    FEATpad = _round_up(FEAT, 128)
    Cpad = _round_up(num_labels, 128)          # lane-dense logits

    in_dtype = sequence_output.dtype           # no upcast; bf16 recommended at scale

    # --- weight preprocessing (outside the kernel, runs once under jit) ------
    # W_all columns: [filter k][tap i] -> w_k[i] (H, F), filter-major, tap-major.
    blocks = [jnp.transpose(w, (1, 0, 2)).reshape(H, fs * F)
              for w, fs in zip(conv_weights, filter_sizes)]
    w_all = jnp.concatenate(blocks, axis=1)                       # (H, NC)
    w_all = jnp.pad(w_all, ((0, 0), (0, NCpad - NC))).astype(in_dtype)

    bias_all = jnp.concatenate([b.reshape(F) for b in conv_biases])
    bias_all = jnp.pad(bias_all, (0, FEATpad - FEAT)).reshape(1, FEATpad)
    bias_all = bias_all.astype(jnp.float32)

    clf_w_pad = jnp.pad(clf_w, ((0, FEATpad - FEAT),
                                (0, Cpad - num_labels))).astype(jnp.float32)
    clf_b_pad = jnp.pad(clf_b.reshape(1, -1),
                        ((0, 0), (0, Cpad - num_labels))).astype(jnp.float32)

    # --- batch-tiled grid ----------------------------------------------------
    if batch_tile is None:
        batch_tile = B if (B <= 8 or B % 8 != 0) else 8
    tb = batch_tile
    assert B % tb == 0, "batch_tile must divide batch"

    kernel = _make_kernel(filter_sizes, F)

    itemsize = jnp.dtype(in_dtype).itemsize
    cost = pl.CostEstimate(
        flops=2 * B * L * H * NCpad + 2 * B * FEATpad * Cpad,
        transcendentals=0,
        bytes_accessed=(B * L * H * itemsize + H * NCpad * itemsize
                        + FEATpad * Cpad * 4 + B * Cpad * 4))

    out = pl.pallas_call(
        kernel,
        out_shape=jax.ShapeDtypeStruct((B, Cpad), jnp.float32),
        grid_spec=pltpu.PrefetchScalarGridSpec(
            num_scalar_prefetch=0,
            grid=(B // tb,),
            in_specs=[
                pl.BlockSpec((tb, L, H), lambda b: (b, 0, 0)),      # x: streamed
                pl.BlockSpec((H, NCpad), lambda b: (0, 0)),         # weights stay
                pl.BlockSpec((1, FEATpad), lambda b: (0, 0)),       #   resident
                pl.BlockSpec((FEATpad, Cpad), lambda b: (0, 0)),
                pl.BlockSpec((1, Cpad), lambda b: (0, 0)),
            ],
            out_specs=pl.BlockSpec((tb, Cpad), lambda b: (b, 0)),
            scratch_shapes=[pltpu.VMEM((tb, FEATpad), jnp.float32)],
        ),
        compiler_params=pltpu.CompilerParams(
            dimension_semantics=("parallel",)),
        cost_estimate=cost,
    )(sequence_output, w_all, bias_all, clf_w_pad, clf_b_pad)

    return out[:, :num_labels]


def reference(sequence_output, conv_weights, conv_biases, clf_w, clf_b):
    """Pure-JAX reference mirroring the PyTorch forward (NCHW conv)."""
    x = sequence_output[:, None, :, :]          # (B, 1, L, H)  == unsqueeze(1)
    pooled = []
    for w, b in zip(conv_weights, conv_biases):
        # (fs, H, F) -> OIHW (F, 1, fs, H)
        w_oihw = jnp.transpose(w, (2, 0, 1))[:, None, :, :]
        y = lax.conv_general_dilated(
            x, w_oihw, window_strides=(1, 1), padding="VALID",
            dimension_numbers=("NCHW", "OIHW", "NCHW"))
        y = y + b.reshape(1, -1, 1, 1)
        y = jnp.squeeze(y, axis=3)              # (B, F, T)
        y = jnp.maximum(y, 0.0)
        pooled.append(jnp.max(y, axis=2))       # (B, F)
    feat = jnp.concatenate(pooled, axis=1)
    return feat @ clf_w + clf_b


if __name__ == "__main__":
    # Small shapes consistent with the module (hidden_size stands in for 768).
    B, L, H = 2, 16, 32
    NUM_FILTERS = 8
    NUM_LABELS = 4

    key = jax.random.PRNGKey(0)
    keys = jax.random.split(key, 2 * len(FILTER_SIZES) + 3)

    sequence_output = jax.random.normal(keys[0], (B, L, H), jnp.float32)

    conv_weights, conv_biases = [], []
    for i, fs in enumerate(FILTER_SIZES):
        conv_weights.append(
            0.05 * jax.random.normal(keys[1 + 2 * i], (fs, H, NUM_FILTERS), jnp.float32))
        conv_biases.append(
            0.05 * jax.random.normal(keys[2 + 2 * i], (1, NUM_FILTERS), jnp.float32))

    clf_w = 0.05 * jax.random.normal(
        keys[-2], (len(FILTER_SIZES) * NUM_FILTERS, NUM_LABELS), jnp.float32)
    clf_b = 0.05 * jax.random.normal(keys[-1], (1, NUM_LABELS), jnp.float32)

    logits = deberta_cnn_classifier(
        sequence_output, conv_weights, conv_biases, clf_w, clf_b)
    logits = jax.block_until_ready(logits)

    ref = reference(sequence_output, conv_weights, conv_biases, clf_w, clf_b)
    assert logits.shape == (B, NUM_LABELS)
    assert jnp.allclose(logits, ref, rtol=1e-4, atol=1e-4), (logits, ref)

    print("KERNEL_OK")
</pallas_src>

<mosaic_0001>
module attributes {stable_mosaic.version = 11 : i64} {
  func.func @kernel(%arg0: i32, %arg1: memref<2x16x32xf32, #tpu.memory_space<vmem>>, %arg2: memref<32x256xf32, #tpu.memory_space<vmem>>, %arg3: memref<1x128xf32, #tpu.memory_space<vmem>>, %arg4: memref<128x128xf32, #tpu.memory_space<vmem>>, %arg5: memref<1x128xf32, #tpu.memory_space<vmem>>, %arg6: memref<2x128xf32, #tpu.memory_space<vmem>>, %arg7: memref<2x128xf32, #tpu.memory_space<vmem>>) attributes {dimension_semantics = [#tpu.dimension_semantics<parallel>], iteration_bounds = array<i64: 1>, scalar_prefetch = 0 : i64, scratch_operands = 1 : i64, tpu.core_type = #tpu.core_type<tc>, window_params = [{transform_indices = @transform_0, window_bounds = array<i64: 2, 16, 32>}, {pipeline_mode = #tpu.pipeline_mode<synchronous>, transform_indices = @transform_1, window_bounds = array<i64: 32, 256>}, {pipeline_mode = #tpu.pipeline_mode<synchronous>, transform_indices = @transform_2, window_bounds = array<i64: 1, 128>}, {pipeline_mode = #tpu.pipeline_mode<synchronous>, transform_indices = @transform_3, window_bounds = array<i64: 128, 128>}, {pipeline_mode = #tpu.pipeline_mode<synchronous>, transform_indices = @transform_4, window_bounds = array<i64: 1, 128>}, {transform_indices = @transform_5, window_bounds = array<i64: 2, 128>}]} {
    %c0 = arith.constant 0 : index
    %c0_0 = arith.constant 0 : index
    %c0_1 = arith.constant 0 : index
    %0 = vector.load %arg1[%c0, %c0_0, %c0_1] : memref<2x16x32xf32, #tpu.memory_space<vmem>>, vector<2x16x32xf32>
    %c0_2 = arith.constant 0 : index
    %c0_3 = arith.constant 0 : index
    %1 = vector.load %arg2[%c0_2, %c0_3] : memref<32x256xf32, #tpu.memory_space<vmem>>, vector<32x256xf32>
    %cst = arith.constant dense<0.000000e+00> : vector<2x16x256xf32>
    %2 = tpu.matmul %0, %1, %cst {dimension_numbers = #tpu.dot_dimension_numbers<[2], [0], [0, 1], [1], [0, 0, 0, 1, 1, 1], [], []>} : vector<2x16x32xf32>, vector<32x256xf32>, vector<2x16x256xf32> -> vector<2x16x256xf32>
    %cst_4 = arith.constant 0.000000e+00 : f32
    %3 = vector.broadcast %cst_4 : f32 to vector<2x128xf32>
    %c0_5 = arith.constant 0 : index
    %c0_6 = arith.constant 0 : index
    %4 = vector.load %arg7[%c0_5, %c0_6] : memref<2x128xf32, #tpu.memory_space<vmem>>, vector<2x128xf32>
    tpu.vector_store %arg7[%c0_5, %c0_6], %3 {strides = array<i32>} : memref<2x128xf32, #tpu.memory_space<vmem>>, vector<2x128xf32>,
    %5 = vector.extract_strided_slice %2 {offsets = [0, 0, 0], sizes = [2, 15, 8], strides = [1, 1, 1]} : vector<2x16x256xf32> to vector<2x15x8xf32>
    %6 = vector.extract_strided_slice %2 {offsets = [0, 1, 8], sizes = [2, 15, 8], strides = [1, 1, 1]} : vector<2x16x256xf32> to vector<2x15x8xf32>
    %7 = arith.addf %5, %6 : vector<2x15x8xf32>
    %cst_7 = arith.constant dense<0xFF800000> : vector<2x8xf32>
    %8 = vector.multi_reduction <maximumf>, %7, %cst_7 [1] : vector<2x15x8xf32> to vector<2x8xf32>
    %c0_8 = arith.constant 0 : index
    %c0_9 = arith.constant 0 : index
    %9 = vector.load %arg7[%c0_8, %c0_9] : memref<2x128xf32, #tpu.memory_space<vmem>>, vector<2x8xf32>
    tpu.vector_store %arg7[%c0_8, %c0_9], %8 {strides = array<i32>} : memref<2x128xf32, #tpu.memory_space<vmem>>, vector<2x8xf32>,
    %10 = vector.extract_strided_slice %2 {offsets = [0, 0, 16], sizes = [2, 13, 8], strides = [1, 1, 1]} : vector<2x16x256xf32> to vector<2x13x8xf32>
    %11 = vector.extract_strided_slice %2 {offsets = [0, 1, 24], sizes = [2, 13, 8], strides = [1, 1, 1]} : vector<2x16x256xf32> to vector<2x13x8xf32>
    %12 = arith.addf %10, %11 : vector<2x13x8xf32>
    %13 = vector.extract_strided_slice %2 {offsets = [0, 2, 32], sizes = [2, 13, 8], strides = [1, 1, 1]} : vector<2x16x256xf32> to vector<2x13x8xf32>
    %14 = arith.addf %12, %13 : vector<2x13x8xf32>
    %15 = vector.extract_strided_slice %2 {offsets = [0, 3, 40], sizes = [2, 13, 8], strides = [1, 1, 1]} : vector<2x16x256xf32> to vector<2x13x8xf32>
    %16 = arith.addf %14, %15 : vector<2x13x8xf32>
    %cst_10 = arith.constant dense<0xFF800000> : vector<2x8xf32>
    %17 = vector.multi_reduction <maximumf>, %16, %cst_10 [1] : vector<2x13x8xf32> to vector<2x8xf32>
    %c0_11 = arith.constant 0 : index
    %c8 = arith.constant 8 : index
    %18 = vector.load %arg7[%c0_11, %c8] : memref<2x128xf32, #tpu.memory_space<vmem>>, vector<2x8xf32>
    tpu.vector_store %arg7[%c0_11, %c8], %17 {strides = array<i32>} : memref<2x128xf32, #tpu.memory_space<vmem>>, vector<2x8xf32>,
    %19 = vector.extract_strided_slice %2 {offsets = [0, 0, 48], sizes = [2, 11, 8], strides = [1, 1, 1]} : vector<2x16x256xf32> to vector<2x11x8xf32>
    %20 = vector.extract_strided_slice %2 {offsets = [0, 1, 56], sizes = [2, 11, 8], strides = [1, 1, 1]} : vector<2x16x256xf32> to vector<2x11x8xf32>
    %21 = arith.addf %19, %20 : vector<2x11x8xf32>
    %22 = vector.extract_strided_slice %2 {offsets = [0, 2, 64], sizes = [2, 11, 8], strides = [1, 1, 1]} : vector<2x16x256xf32> to vector<2x11x8xf32>
    %23 = arith.addf %21, %22 : vector<2x11x8xf32>
    %24 = vector.extract_strided_slice %2 {offsets = [0, 3, 72], sizes = [2, 11, 8], strides = [1, 1, 1]} : vector<2x16x256xf32> to vector<2x11x8xf32>
    %25 = arith.addf %23, %24 : vector<2x11x8xf32>
    %26 = vector.extract_strided_slice %2 {offsets = [0, 4, 80], sizes = [2, 11, 8], strides = [1, 1, 1]} : vector<2x16x256xf32> to vector<2x11x8xf32>
    %27 = arith.addf %25, %26 : vector<2x11x8xf32>
    %28 = vector.extract_strided_slice %2 {offsets = [0, 5, 88], sizes = [2, 11, 8], strides = [1, 1, 1]} : vector<2x16x256xf32> to vector<2x11x8xf32>
    %29 = arith.addf %27, %28 : vector<2x11x8xf32>
    %cst_12 = arith.constant dense<0xFF800000> : vector<2x8xf32>
    %30 = vector.multi_reduction <maximumf>, %29, %cst_12 [1] : vector<2x11x8xf32> to vector<2x8xf32>
    %c0_13 = arith.constant 0 : index
    %c16 = arith.constant 16 : index
    %31 = vector.load %arg7[%c0_13, %c16] : memref<2x128xf32, #tpu.memory_space<vmem>>, vector<2x8xf32>
    tpu.vector_store %arg7[%c0_13, %c16], %30 {strides = array<i32>} : memref<2x128xf32, #tpu.memory_space<vmem>>, vector<2x8xf32>,
    %32 = vector.extract_strided_slice %2 {offsets = [0, 0, 96], sizes = [2, 9, 8], strides = [1, 1, 1]} : vector<2x16x256xf32> to vector<2x9x8xf32>
    %33 = vector.extract_strided_slice %2 {offsets = [0, 1, 104], sizes = [2, 9, 8], strides = [1, 1, 1]} : vector<2x16x256xf32> to vector<2x9x8xf32>
    %34 = arith.addf %32, %33 : vector<2x9x8xf32>
    %35 = vector.extract_strided_slice %2 {offsets = [0, 2, 112], sizes = [2, 9, 8], strides = [1, 1, 1]} : vector<2x16x256xf32> to vector<2x9x8xf32>
    %36 = arith.addf %34, %35 : vector<2x9x8xf32>
    %37 = vector.extract_strided_slice %2 {offsets = [0, 3, 120], sizes = [2, 9, 8], strides = [1, 1, 1]} : vector<2x16x256xf32> to vector<2x9x8xf32>
    %38 = arith.addf %36, %37 : vector<2x9x8xf32>
    %39 = vector.extract_strided_slice %2 {offsets = [0, 4, 128], sizes = [2, 9, 8], strides = [1, 1, 1]} : vector<2x16x256xf32> to vector<2x9x8xf32>
    %40 = arith.addf %38, %39 : vector<2x9x8xf32>
    %41 = vector.extract_strided_slice %2 {offsets = [0, 5, 136], sizes = [2, 9, 8], strides = [1, 1, 1]} : vector<2x16x256xf32> to vector<2x9x8xf32>
    %42 = arith.addf %40, %41 : vector<2x9x8xf32>
    %43 = vector.extract_strided_slice %2 {offsets = [0, 6, 144], sizes = [2, 9, 8], strides = [1, 1, 1]} : vector<2x16x256xf32> to vector<2x9x8xf32>
    %44 = arith.addf %42, %43 : vector<2x9x8xf32>
    %45 = vector.extract_strided_slice %2 {offsets = [0, 7, 152], sizes = [2, 9, 8], strides = [1, 1, 1]} : vector<2x16x256xf32> to vector<2x9x8xf32>
    %46 = arith.addf %44, %45 : vector<2x9x8xf32>
    %cst_14 = arith.constant dense<0xFF800000> : vector<2x8xf32>
    %47 = vector.multi_reduction <maximumf>, %46, %cst_14 [1] : vector<2x9x8xf32> to vector<2x8xf32>
    %c0_15 = arith.constant 0 : index
    %c24 = arith.constant 24 : index
    %48 = vector.load %arg7[%c0_15, %c24] : memref<2x128xf32, #tpu.memory_space<vmem>>, vector<2x8xf32>
    tpu.vector_store %arg7[%c0_15, %c24], %47 {strides = array<i32>} : memref<2x128xf32, #tpu.memory_space<vmem>>, vector<2x8xf32>,
    %49 = vector.extract_strided_slice %2 {offsets = [0, 0, 160], sizes = [2, 7, 8], strides = [1, 1, 1]} : vector<2x16x256xf32> to vector<2x7x8xf32>
    %50 = vector.extract_strided_slice %2 {offsets = [0, 1, 168], sizes = [2, 7, 8], strides = [1, 1, 1]} : vector<2x16x256xf32> to vector<2x7x8xf32>
    %51 = arith.addf %49, %50 : vector<2x7x8xf32>
    %52 = vector.extract_strided_slice %2 {offsets = [0, 2, 176], sizes = [2, 7, 8], strides = [1, 1, 1]} : vector<2x16x256xf32> to vector<2x7x8xf32>
    %53 = arith.addf %51, %52 : vector<2x7x8xf32>
    %54 = vector.extract_strided_slice %2 {offsets = [0, 3, 184], sizes = [2, 7, 8], strides = [1, 1, 1]} : vector<2x16x256xf32> to vector<2x7x8xf32>
    %55 = arith.addf %53, %54 : vector<2x7x8xf32>
    %56 = vector.extract_strided_slice %2 {offsets = [0, 4, 192], sizes = [2, 7, 8], strides = [1, 1, 1]} : vector<2x16x256xf32> to vector<2x7x8xf32>
    %57 = arith.addf %55, %56 : vector<2x7x8xf32>
    %58 = vector.extract_strided_slice %2 {offsets = [0, 5, 200], sizes = [2, 7, 8], strides = [1, 1, 1]} : vector<2x16x256xf32> to vector<2x7x8xf32>
    %59 = arith.addf %57, %58 : vector<2x7x8xf32>
    %60 = vector.extract_strided_slice %2 {offsets = [0, 6, 208], sizes = [2, 7, 8], strides = [1, 1, 1]} : vector<2x16x256xf32> to vector<2x7x8xf32>
    %61 = arith.addf %59, %60 : vector<2x7x8xf32>
    %62 = vector.extract_strided_slice %2 {offsets = [0, 7, 216], sizes = [2, 7, 8], strides = [1, 1, 1]} : vector<2x16x256xf32> to vector<2x7x8xf32>
    %63 = arith.addf %61, %62 : vector<2x7x8xf32>
    %64 = vector.extract_strided_slice %2 {offsets = [0, 8, 224], sizes = [2, 7, 8], strides = [1, 1, 1]} : vector<2x16x256xf32> to vector<2x7x8xf32>
    %65 = arith.addf %63, %64 : vector<2x7x8xf32>
    %66 = vector.extract_strided_slice %2 {offsets = [0, 9, 232], sizes = [2, 7, 8], strides = [1, 1, 1]} : vector<2x16x256xf32> to vector<2x7x8xf32>
    %67 = arith.addf %65, %66 : vector<2x7x8xf32>
    %cst_16 = arith.constant dense<0xFF800000> : vector<2x8xf32>
    %68 = vector.multi_reduction <maximumf>, %67, %cst_16 [1] : vector<2x7x8xf32> to vector<2x8xf32>
    %c0_17 = arith.constant 0 : index
    %c32 = arith.constant 32 : index
    %69 = vector.load %arg7[%c0_17, %c32] : memref<2x128xf32, #tpu.memory_space<vmem>>, vector<2x8xf32>
    tpu.vector_store %arg7[%c0_17, %c32], %68 {strides = array<i32>} : memref<2x128xf32, #tpu.memory_space<vmem>>, vector<2x8xf32>,
    %c0_18 = arith.constant 0 : index
    %c0_19 = arith.constant 0 : index
    %70 = vector.load %arg7[%c0_18, %c0_19] : memref<2x128xf32, #tpu.memory_space<vmem>>, vector<2x128xf32>
    %c0_20 = arith.constant 0 : index
    %c0_21 = arith.constant 0 : index
    %71 = vector.load %arg3[%c0_20, %c0_21] : memref<1x128xf32, #tpu.memory_space<vmem>>, vector<1x128xf32>
    %72 = vector.broadcast %71 : vector<1x128xf32> to vector<2x128xf32>
    %73 = arith.addf %70, %72 : vector<2x128xf32>
    %cst_22 = arith.constant 0.000000e+00 : f32
    %74 = vector.broadcast %cst_22 : f32 to vector<2x128xf32>
    %75 = arith.maximumf %73, %74 : vector<2x128xf32>
    %c0_23 = arith.constant 0 : index
    %c0_24 = arith.constant 0 : index
    %76 = vector.load %arg4[%c0_23, %c0_24] : memref<128x128xf32, #tpu.memory_space<vmem>>, vector<128x128xf32>
    %cst_25 = arith.constant dense<0.000000e+00> : vector<2x128xf32>
    %77 = tpu.matmul %75, %76, %cst_25 {dimension_numbers = #tpu.dot_dimension_numbers<[1], [0], [0], [1], [0, 0, 1, 1], [], []>} : vector<2x128xf32>, vector<128x128xf32>, vector<2x128xf32> -> vector<2x128xf32>
    %c0_26 = arith.constant 0 : index
    %c0_27 = arith.constant 0 : index
    %78 = vector.load %arg5[%c0_26, %c0_27] : memref<1x128xf32, #tpu.memory_space<vmem>>, vector<1x128xf32>
    %79 = vector.broadcast %78 : vector<1x128xf32> to vector<2x128xf32>
    %80 = arith.addf %77, %79 : vector<2x128xf32>
    %c0_28 = arith.constant 0 : index
    %c0_29 = arith.constant 0 : index
    %81 = vector.load %arg6[%c0_28, %c0_29] : memref<2x128xf32, #tpu.memory_space<vmem>>, vector<2x128xf32>
    tpu.vector_store %arg6[%c0_28, %c0_29], %80 {strides = array<i32>} : memref<2x128xf32, #tpu.memory_space<vmem>>, vector<2x128xf32>,
    return
  }
  func.func @transform_0(%arg0: i32) -> (i32, i32, i32) {
    %c0_i32 = arith.constant 0 : i32
    %c0_i32_0 = arith.constant 0 : i32
    %c0_i32_1 = arith.constant 0 : i32
    return %arg0, %c0_i32, %c0_i32_0 : i32, i32, i32
  }
  func.func @transform_1(%arg0: i32) -> (i32, i32) {
    %c0_i32 = arith.constant 0 : i32
    %c0_i32_0 = arith.constant 0 : i32
    %c0_i32_1 = arith.constant 0 : i32
    return %c0_i32, %c0_i32_0 : i32, i32
  }
  func.func @transform_2(%arg0: i32) -> (i32, i32) {
    %c0_i32 = arith.constant 0 : i32
    %c0_i32_0 = arith.constant 0 : i32
    %c0_i32_1 = arith.constant 0 : i32
    return %c0_i32, %c0_i32_0 : i32, i32
  }
  func.func @transform_3(%arg0: i32) -> (i32, i32) {
    %c0_i32 = arith.constant 0 : i32
    %c0_i32_0 = arith.constant 0 : i32
    %c0_i32_1 = arith.constant 0 : i32
    return %c0_i32, %c0_i32_0 : i32, i32
  }
  func.func @transform_4(%arg0: i32) -> (i32, i32) {
    %c0_i32 = arith.constant 0 : i32
    %c0_i32_0 = arith.constant 0 : i32
    %c0_i32_1 = arith.constant 0 : i32
    return %c0_i32, %c0_i32_0 : i32, i32
  }
  func.func @transform_5(%arg0: i32) -> (i32, i32) {
    %c0_i32 = arith.constant 0 : i32
    %c0_i32_0 = arith.constant 0 : i32
    return %arg0, %c0_i32 : i32, i32
  }
}

</mosaic_0001>

<llo_original>
// kernel: tpu_custom_call.1
$region0: #{tpu_custom_call.1}
  #allocation0 [shape = 'u32[]', space=smem, size = 0x4, offset = 0x4, fixed_abs, tag = 'smem constant byte address 0x4 - core index']
  #allocation1 [shape = 'u32[144,128]{1,0:T(1,128)}', space=vmem, size = 0x12000, scoped, tag = 'internal scratch']
  #allocation2 [shape = 'f32[2,128]{1,0:T(2,128)}', space=vmem, size = 0x400, scoped, tag = 'scratch operand']
  %s0 = inlined_call_operand.hbm [shape: f32[2,16,32], index: 0, kind: input, shape index: {}]
  %s1 = inlined_call_operand.hbm [shape: f32[32,256], index: 1, kind: input, shape index: {}]
  %s2 = inlined_call_operand.vmem [shape: f32[1,128], index: 2, kind: input, shape index: {}]
  %s3 = inlined_call_operand.hbm [shape: f32[128,128], index: 3, kind: input, shape index: {}]
  %s4 = inlined_call_operand.vmem [shape: f32[1,128], index: 4, kind: input, shape index: {}]
  %s5 = inlined_call_operand.hbm [shape: f32[2,128], index: 5, kind: output, shape index: {}]
  %s6 = sld [smem:[#allocation0]]
  $region42: #{tpu_custom_call.1} parent=0
    _
  %s8 = ssub.s32 1, %s6
  %s9 = scalar_select 0, %s8, %s6
  $region1: #{tpu_custom_call.1} parent=0
    #allocation3 [shape = 'u8[16384]{0}', space=vmem, size = 0x4000, scoped, tag = 'input window, operand 0, single buffered']
    #allocation4 [shape = 's32[1]{0}', space=sflag, size = 0x4, scoped, tag = 'scoped memory for tpu_custom_call.1']
    #allocation5 [shape = 's32[1]{0}', space=sflag, size = 0x4, scoped, tag = 'scoped memory for tpu_custom_call.1']
    #allocation6 [shape = 'u8[32768]{0}', space=vmem, size = 0x8000, scoped, tag = 'input window, operand 1, single buffered']
    #allocation7 [shape = 's32[1]{0}', space=sflag, size = 0x4, scoped, tag = 'scoped memory for tpu_custom_call.1']
    #allocation8 [shape = 'u8[65536]{0}', space=vmem, size = 0x10000, scoped, tag = 'input window, operand 3, single buffered']
    #allocation9 [shape = 'u8[1024]{0}', space=vmem, size = 0x400, scoped, tag = 'output window, operand 0, single buffered']
    %10 = vsyncpa [#allocation4], 0
    %11 = vsyncpa [#allocation7], 0
    %12 = vsyncpa [#allocation5], 0
    // Predicated region
    $region2: #{tpu_custom_call.1} parent=1 // pred_check
      _
    $region3: #{tpu_custom_call.1} parent=1 // pred_check_branch
      %14 = sbr.rel (0) target = $region5
    $region4: #{tpu_custom_call.1} parent=1 // pred_region
      %s16 = ssub.s32 512, 512
      %17 = vsyncadd [#allocation4], %s16
      %s18 = sshll.u32 [#allocation3], 4
      %s19 = int_to_ptr.vmem [resolvable:$true] %s18
      %24 = dma.hbm_to_vmem [thread:$0]  %s0, 512, %s19, [#allocation4], 128, 128, 8
    $region5: #{tpu_custom_call.1} parent=1 // pred_fallthru
      _
    // Predicated region
    $region6: #{tpu_custom_call.1} parent=1 // pred_check
      _
    $region7: #{tpu_custom_call.1} parent=1 // pred_check_branch
      %26 = sbr.rel (0) target = $region9
    $region8: #{tpu_custom_call.1} parent=1 // pred_region
      %s28 = ssub.s32 1024, 1024
      %29 = vsyncadd [#allocation7], %s28
      %s30 = sshll.u32 [#allocation6], 4
      %s31 = int_to_ptr.vmem [resolvable:$true] %s30
      %36 = dma.hbm_to_vmem [thread:$0]  %s1, 1024, %s31, [#allocation7], 256, 256, 16
    $region9: #{tpu_custom_call.1} parent=1 // pred_fallthru
      _
    // Predicated region
    $region10: #{tpu_custom_call.1} parent=1 // pred_check
      _
    $region11: #{tpu_custom_call.1} parent=1 // pred_check_branch
      %38 = sbr.rel (0) target = $region13
    $region12: #{tpu_custom_call.1} parent=1 // pred_region
      _
    $region13: #{tpu_custom_call.1} parent=1 // pred_fallthru
      _
    // Predicated region
    $region14: #{tpu_custom_call.1} parent=1 // pred_check
      _
    $region15: #{tpu_custom_call.1} parent=1 // pred_check_branch
      %40 = sbr.rel (0) target = $region17
    $region16: #{tpu_custom_call.1} parent=1 // pred_region
      %s42 = ssub.s32 2048, 2048
      %43 = vsyncadd [#allocation7], %s42
      %s44 = sshll.u32 [#allocation8], 4
      %s45 = int_to_ptr.vmem [resolvable:$true] %s44
      %50 = dma.hbm_to_vmem [thread:$0]  %s3, 2048, %s45, [#allocation7], 128, 128, 8
    $region17: #{tpu_custom_call.1} parent=1 // pred_fallthru
      _
    // Predicated region
    $region18: #{tpu_custom_call.1} parent=1 // pred_check
      _
    $region19: #{tpu_custom_call.1} parent=1 // pred_check_branch
      %52 = sbr.rel (0) target = $region21
    $region20: #{tpu_custom_call.1} parent=1 // pred_region
      _
    $region21: #{tpu_custom_call.1} parent=1 // pred_fallthru
      _
    // Predicated region
    $region22: #{tpu_custom_call.1} parent=1 // pred_check
      _
    $region23: #{tpu_custom_call.1} parent=1 // pred_check_branch
      %54 = sbr.rel (0) target = $region25
    $region24: #{tpu_custom_call.1} parent=1 // pred_region
      %55 = dma.done [#allocation4], 512
    $region25: #{tpu_custom_call.1} parent=1 // pred_fallthru
      _
    // Predicated region
    $region26: #{tpu_custom_call.1} parent=1 // pred_check
      _
    $region27: #{tpu_custom_call.1} parent=1 // pred_check_branch
      %57 = sbr.rel (0) target = $region29
    $region28: #{tpu_custom_call.1} parent=1 // pred_region
      %58 = dma.done [#allocation7], 1024
    $region29: #{tpu_custom_call.1} parent=1 // pred_fallthru
      _
    // Predicated region
    $region30: #{tpu_custom_call.1} parent=1 // pred_check
      _
    $region31: #{tpu_custom_call.1} parent=1 // pred_check_branch
      %60 = sbr.rel (0) target = $region33
    $region32: #{tpu_custom_call.1} parent=1 // pred_region
      %61 = dma.done [#allocation7], 2048
    $region33: #{tpu_custom_call.1} parent=1 // pred_fallthru
      _
    %v62 = vld [vmem:[#allocation3] sm:$0xff]
    %v63 = vld [vmem:[#allocation3 + $0x8] sm:$0xff]
    %v64 = vld [vmem:[#allocation3 + $0x10] sm:$0xff]
    %v65 = vld [vmem:[#allocation3 + $0x18] sm:$0xff]
    %v66 = vld [vmem:[#allocation6] sm:$0xff]
    %v67 = vld [vmem:[#allocation6 + $0x8] sm:$0xff]
    %v68 = vld [vmem:[#allocation6 + $0x10] sm:$0xff]
    %v69 = vld [vmem:[#allocation6 + $0x18] sm:$0xff]
    %v70 = vld [vmem:[#allocation6 + $0x20] sm:$0xff]
    %v71 = vld [vmem:[#allocation6 + $0x28] sm:$0xff]
    %v72 = vld [vmem:[#allocation6 + $0x30] sm:$0xff]
    %v73 = vld [vmem:[#allocation6 + $0x38] sm:$0xff]
    %vm74 = vcmask 261120
    %v76 = vsel %vm74, %v62, 0
    %v79 = vsel %vm74, %v63, 0
    %v82 = vsel %vm74, %v64, 0
    %v85 = vsel %vm74, %v65, 0
    %87 = vmatprep.subr.mxu0 0.0
    %88 = vmatpush1.msra.mxu0 0.0
    %89 = vmatprep.subr.mxu0 0.0
    %90 = vmatpush1.msra.mxu0 0.0
    %91 = vmatprep.subr.mxu0 0.0
    %92 = vmatpush1.msra.mxu0 0.0
    %93 = vmatprep.subr.mxu0 0.0
    %94 = vmatpush1.msra.mxu0 0.0
    %95 = vmatprep.subr.mxu0 0.0
    %96 = vmatpush1.msra.mxu0 0.0
    %97 = vmatprep.subr.mxu0 0.0
    %98 = vmatpush1.msra.mxu0 0.0
    %99 = vmatprep.subr.mxu0 0.0
    %100 = vmatpush1.msra.mxu0 0.0
    %101 = vmatprep.subr.mxu0 0.0
    %102 = vmatpush1.msra.mxu0 0.0
    %103 = vmatprep.subr.mxu0 0.0
    %104 = vmatpush1.msra.mxu0 0.0
    %105 = vmatprep.subr.mxu0 0.0
    %106 = vmatpush1.msra.mxu0 0.0
    %107 = vmatprep.subr.mxu0 0.0
    %108 = vmatpush1.msra.mxu0 0.0
    %109 = vmatprep.subr.mxu0 0.0
    %110 = vmatpush1.msra.mxu0 0.0
    %111 = vmatprep.subr.mxu0 %v73
    %112 = vmatpush1.msra.mxu0 %v72
    %113 = vmatprep.subr.mxu0 %v71
    %114 = vmatpush1.msra.mxu0 %v70
    %115 = vmatprep.subr.mxu0 %v69
    %116 = vmatpush1.msra.mxu0 %v68
    %117 = vmatprep.subr.mxu0 %v67
    %118 = vmatpush1.msra.mxu0 %v66
    %119 = vmatprep.subr.mxu0 0.0
    %120 = vmatpush2.msra.mxu0 0.0
    %121 = vmatprep.subr.mxu0 0.0
    %122 = vmatpush2.msra.mxu0 0.0
    %123 = vmatprep.subr.mxu0 0.0
    %124 = vmatpush2.msra.mxu0 0.0
    %125 = vmatprep.subr.mxu0 0.0
    %126 = vmatpush2.msra.mxu0 0.0
    %127 = vmatprep.subr.mxu0 0.0
    %128 = vmatpush2.msra.mxu0 0.0
    %129 = vmatprep.subr.mxu0 0.0
    %130 = vmatpush2.msra.mxu0 0.0
    %131 = vmatprep.subr.mxu0 0.0
    %132 = vmatpush2.msra.mxu0 0.0
    %133 = vmatprep.subr.mxu0 0.0
    %134 = vmatpush2.msra.mxu0 0.0
    %135 = vmatprep.subr.mxu0 0.0
    %136 = vmatpush2.msra.mxu0 0.0
    %137 = vmatprep.subr.mxu0 0.0
    %138 = vmatpush2.msra.mxu0 0.0
    %139 = vmatprep.subr.mxu0 0.0
    %140 = vmatpush2.msra.mxu0 0.0
    %141 = vmatprep.subr.mxu0 0.0
    %142 = vmatpush2.msra.mxu0 0.0
    %143 = vmatprep.subr.mxu0 0.0
    %144 = vmatpush2.msra.mxu0 0.0
    %145 = vmatprep.subr.mxu0 0.0
    %146 = vmatpush2.msra.mxu0 0.0
    %147 = vmatprep.subr.mxu0 0.0
    %148 = vmatpush2.msra.mxu0 0.0
    %149 = vmatprep.subr.mxu0 0.0
    %150 = vmatpush2.msra.mxu0 0.0
    %151 = vmatprep.mubr.f32.mxu0 0.0
    %152 = vmatmul.mubr.f32.gmra.mxu0 %v76
    %v153 = vpop.f32.mrf.mxu0
    %v154 = vadd.f32 0.0, %v153
    %v155 = vpop.f32.mrf.mxu0
    %v156 = vadd.f32 0.0, %v155
    %157 = vmatprep.mubr.f32.mxu0 0.0
    %158 = vmatmul.mubr.f32.gmra.mxu0 %v79
    %v159 = vpop.f32.mrf.mxu0
    %v160 = vadd.f32 0.0, %v159
    %v161 = vpop.f32.mrf.mxu0
    %v162 = vadd.f32 0.0, %v161
    %163 = vmatprep.mubr.f32.mxu0 0.0
    %164 = vmatmul.mubr.f32.gmra.mxu0 %v82
    %v165 = vpop.f32.mrf.mxu0
    %v166 = vadd.f32 0.0, %v165
    %v167 = vpop.f32.mrf.mxu0
    %v168 = vadd.f32 0.0, %v167
    %169 = vmatprep.mubr.f32.mxu0 0.0
    %170 = vmatmul.mubr.f32.gmra.mxu0 %v85
    %v171 = vpop.f32.mrf.mxu0
    %v172 = vadd.f32 0.0, %v171
    %v173 = vpop.f32.mrf.mxu0
    %v174 = vadd.f32 0.0, %v173
    %175 = vdwg.mxu0
    %176 = vst [vmem:[#allocation2] sm:$0x3] 0.0
    %vm181 = vcmask 1046528
    %v182 = vrot.slane %v154, 1
    %v183 = vrot.slane %v160, 1
    %v184 = vsel %vm181, %v182, %v183
    %v185 = vrot.slane %v166, 1
    %v186 = vrot.slane %v172, 1
    %v187 = vsel %vm181, %v185, %v186
    %188 = vrot.lane.b32.xlu0 %v184, 120
    %v189 = vpop.permute.xlu0 %188
    %190 = vrot.lane.b32.xlu0 %v183, 120
    %v191 = vpop.permute.xlu0 %190
    %192 = vrot.lane.b32.xlu0 %v187, 120
    %v193 = vpop.permute.xlu0 %192
    %194 = vrot.lane.b32.xlu0 %v186, 120
    %v195 = vpop.permute.xlu0 %194
    %v200 = vadd.f32 %v154, %v189
    %v201 = vadd.f32 %v160, %v191
    %v202 = vadd.f32 %v166, %v193
    %v203 = vadd.f32 %v172, %v195
    %vm204 = vcmask 64512
    %v205 = vsel %vm204, %v200, -inf
    %vm206 = vcmask 63488
    %v207 = vsel %vm206, %v201, -inf
    %v208 = vmax.f32 %v205, %v207
    %v209 = vrot.slane %v208, 4
    %v210 = vmax.f32 %v208, %v209
    %v211 = vrot.slane %v210, 2
    %v212 = vmax.f32 %v210, %v211
    %v213 = vrot.slane %v212, 1
    %v214 = vmax.f32 %v212, %v213
    %v215 = vsel %vm204, %v202, -inf
    %v216 = vsel %vm206, %v203, -inf
    %v217 = vmax.f32 %v215, %v216
    %v218 = vrot.slane %v217, 4
    %v219 = vmax.f32 %v217, %v218
    %v220 = vrot.slane %v219, 2
    %v221 = vmax.f32 %v219, %v220
    %v222 = vrot.slane %v221, 1
    %v223 = vmax.f32 %v221, %v222
    %vm226 = vcmask 1041409
    %v227 = vsel %vm226, %v223, %v214
    %vm229 = vcmask 58368
    %230 = vst.msk [vmem:[#allocation2] sm:$0x3] %vm229, %v227
    %vm231 = vcmask 1045504
    %v232 = vrot.slane %v154, 2
    %v233 = vrot.slane %v160, 2
    %v234 = vsel %vm231, %v232, %v233
    %v235 = vrot.slane %v166, 2
    %v236 = vrot.slane %v172, 2
    %v237 = vsel %vm231, %v235, %v236
    %238 = vrot.lane.b32.xlu0 %v234, 112
    %v239 = vpop.permute.xlu0 %238
    %240 = vrot.lane.b32.xlu0 %v233, 112
    %v241 = vpop.permute.xlu0 %240
    %242 = vrot.lane.b32.xlu0 %v237, 112
    %v243 = vpop.permute.xlu0 %242
    %244 = vrot.lane.b32.xlu0 %v236, 112
    %v245 = vpop.permute.xlu0 %244
    %v250 = vadd.f32 %v200, %v239
    %v251 = vadd.f32 %v201, %v241
    %v252 = vadd.f32 %v202, %v243
    %v253 = vadd.f32 %v203, %v245
    %vm254 = vcmask 1044480
    %v255 = vrot.slane %v154, 3
    %v256 = vrot.slane %v160, 3
    %v257 = vsel %vm254, %v255, %v256
    %v258 = vrot.slane %v166, 3
    %v259 = vrot.slane %v172, 3
    %v260 = vsel %vm254, %v258, %v259
    %261 = vrot.lane.b32.xlu0 %v257, 104
    %v262 = vpop.permute.xlu0 %261
    %263 = vrot.lane.b32.xlu0 %v256, 104
    %v264 = vpop.permute.xlu0 %263
    %265 = vrot.lane.b32.xlu0 %v260, 104
    %v266 = vpop.permute.xlu0 %265
    %267 = vrot.lane.b32.xlu0 %v259, 104
    %v268 = vpop.permute.xlu0 %267
    %v273 = vadd.f32 %v250, %v262
    %v274 = vadd.f32 %v251, %v264
    %v275 = vadd.f32 %v252, %v266
    %v276 = vadd.f32 %v253, %v268
    %vm277 = vcmask 195712
    %v278 = vsel %vm277, %v273, -inf
    %vm279 = vcmask 192640
    %v280 = vsel %vm279, %v274, -inf
    %v281 = vmax.f32 %v278, %v280
    %v282 = vrot.slane %v281, 4
    %v283 = vmax.f32 %v281, %v282
    %v284 = vrot.slane %v283, 2
    %v285 = vmax.f32 %v283, %v284
    %v286 = vrot.slane %v285, 1
    %v287 = vmax.f32 %v285, %v286
    %v288 = vsel %vm277, %v275, -inf
    %v289 = vsel %vm279, %v276, -inf
    %v290 = vmax.f32 %v288, %v289
    %v291 = vrot.slane %v290, 4
    %v292 = vmax.f32 %v290, %v291
    %v293 = vrot.slane %v292, 2
    %v294 = vmax.f32 %v292, %v293
    %v295 = vrot.slane %v294, 1
    %v296 = vmax.f32 %v294, %v295
    %v299 = vsel %vm226, %v296, %v287
    %300 = vrot.lane.b32.xlu0 %v299, 120
    %v301 = vpop.permute.xlu0 %300
    %vm303 = vcmask 123968
    %304 = vst.msk [vmem:[#allocation2] sm:$0x3] %vm303, %v301
    %vm305 = vcmask 1043456
    %v306 = vrot.slane %v154, 4
    %v307 = vrot.slane %v160, 4
    %v308 = vsel %vm305, %v306, %v307
    %v309 = vrot.slane %v166, 4
    %v310 = vrot.slane %v172, 4
    %v311 = vsel %vm305, %v309, %v310
    %312 = vrot.lane.b32.xlu0 %v308, 96
    %v313 = vpop.permute.xlu0 %312
    %314 = vrot.lane.b32.xlu0 %v307, 96
    %v315 = vpop.permute.xlu0 %314
    %316 = vrot.lane.b32.xlu0 %v311, 96
    %v317 = vpop.permute.xlu0 %316
    %318 = vrot.lane.b32.xlu0 %v310, 96
    %v319 = vpop.permute.xlu0 %318
    %v324 = vadd.f32 %v273, %v313
    %v325 = vadd.f32 %v274, %v315
    %v326 = vadd.f32 %v275, %v317
    %v327 = vadd.f32 %v276, %v319
    %vm328 = vcmask 1042432
    %v329 = vrot.slane %v154, 5
    %v330 = vrot.slane %v160, 5
    %v331 = vsel %vm328, %v329, %v330
    %v332 = vrot.slane %v166, 5
    %v333 = vrot.slane %v172, 5
    %v334 = vsel %vm328, %v332, %v333
    %335 = vrot.lane.b32.xlu0 %v331, 88
    %v336 = vpop.permute.xlu0 %335
    %337 = vrot.lane.b32.xlu0 %v330, 88
    %v338 = vpop.permute.xlu0 %337
    %339 = vrot.lane.b32.xlu0 %v334, 88
    %v340 = vpop.permute.xlu0 %339
    %341 = vrot.lane.b32.xlu0 %v333, 88
    %v342 = vpop.permute.xlu0 %341
    %v347 = vadd.f32 %v324, %v336
    %v348 = vadd.f32 %v325, %v338
    %v349 = vadd.f32 %v326, %v340
    %v350 = vadd.f32 %v327, %v342
    %vm351 = vcmask 458112
    %v352 = vsel %vm351, %v347, -inf
    %vm353 = vcmask 452992
    %v354 = vsel %vm353, %v348, -inf
    %v355 = vmax.f32 %v352, %v354
    %v356 = vrot.slane %v355, 4
    %v357 = vmax.f32 %v355, %v356
    %v358 = vrot.slane %v357, 2
    %v359 = vmax.f32 %v357, %v358
    %v360 = vrot.slane %v359, 1
    %v361 = vmax.f32 %v359, %v360
    %v362 = vsel %vm351, %v349, -inf
    %v363 = vsel %vm353, %v350, -inf
    %v364 = vmax.f32 %v362, %v363
    %v365 = vrot.slane %v364, 4
    %v366 = vmax.f32 %v364, %v365
    %v367 = vrot.slane %v366, 2
    %v368 = vmax.f32 %v366, %v367
    %v369 = vrot.slane %v368, 1
    %v370 = vmax.f32 %v368, %v369
    %v373 = vsel %vm226, %v370, %v361
    %374 = vrot.lane.b32.xlu0 %v373, 96
    %v375 = vpop.permute.xlu0 %374
    %vm377 = vcmask 189568
    %378 = vst.msk [vmem:[#allocation2] sm:$0x3] %vm377, %v375
    %v383 = vrot.slane %v156, 4
    %v384 = vrot.slane %v162, 4
    %v385 = vsel %vm305, %v383, %v384
    %v386 = vrot.slane %v168, 4
    %v387 = vrot.slane %v174, 4
    %v388 = vsel %vm305, %v386, %v387
    %389 = vrot.lane.b32.xlu0 %v385, 96
    %v390 = vpop.permute.xlu0 %389
    %391 = vrot.lane.b32.xlu0 %v384, 96
    %v392 = vpop.permute.xlu0 %391
    %393 = vrot.lane.b32.xlu0 %v388, 96
    %v394 = vpop.permute.xlu0 %393
    %395 = vrot.lane.b32.xlu0 %v387, 96
    %v396 = vpop.permute.xlu0 %395
    %v401 = vadd.f32 %v273, %v390
    %v402 = vadd.f32 %v274, %v392
    %v403 = vadd.f32 %v275, %v394
    %v404 = vadd.f32 %v276, %v396
    %v405 = vrot.slane %v156, 5
    %v406 = vrot.slane %v162, 5
    %v407 = vsel %vm328, %v405, %v406
    %v408 = vrot.slane %v168, 5
    %v409 = vrot.slane %v174, 5
    %v410 = vsel %vm328, %v408, %v409
    %411 = vrot.lane.b32.xlu0 %v407, 88
    %v412 = vpop.permute.xlu0 %411
    %413 = vrot.lane.b32.xlu0 %v406, 88
    %v414 = vpop.permute.xlu0 %413
    %415 = vrot.lane.b32.xlu0 %v410, 88
    %v416 = vpop.permute.xlu0 %415
    %417 = vrot.lane.b32.xlu0 %v409, 88
    %v418 = vpop.permute.xlu0 %417
    %v423 = vadd.f32 %v401, %v412
    %v424 = vadd.f32 %v402, %v414
    %v425 = vadd.f32 %v403, %v416
    %v426 = vadd.f32 %v404, %v418
    %vm427 = vcmask 1041408
    %v428 = vrot.slane %v156, 6
    %v429 = vrot.slane %v162, 6
    %v430 = vsel %vm427, %v428, %v429
    %v431 = vrot.slane %v168, 6
    %v432 = vrot.slane %v174, 6
    %v433 = vsel %vm427, %v431, %v432
    %434 = vrot.lane.b32.xlu0 %v430, 80
    %v435 = vpop.permute.xlu0 %434
    %436 = vrot.lane.b32.xlu0 %v429, 80
    %v437 = vpop.permute.xlu0 %436
    %438 = vrot.lane.b32.xlu0 %v433, 80
    %v439 = vpop.permute.xlu0 %438
    %440 = vrot.lane.b32.xlu0 %v432, 80
    %v441 = vpop.permute.xlu0 %440
    %v446 = vadd.f32 %v423, %v435
    %v447 = vadd.f32 %v424, %v437
    %v448 = vadd.f32 %v425, %v439
    %v449 = vadd.f32 %v426, %v441
    %vm450 = vcmask 1040384
    %v451 = vrot.slane %v156, 7
    %v452 = vrot.slane %v162, 7
    %v453 = vsel %vm450, %v451, %v452
    %v454 = vrot.slane %v168, 7
    %v455 = vrot.slane %v174, 7
    %v456 = vsel %vm450, %v454, %v455
    %457 = vrot.lane.b32.xlu0 %v453, 72
    %v458 = vpop.permute.xlu0 %457
    %459 = vrot.lane.b32.xlu0 %v452, 72
    %v460 = vpop.permute.xlu0 %459
    %461 = vrot.lane.b32.xlu0 %v456, 72
    %v462 = vpop.permute.xlu0 %461
    %463 = vrot.lane.b32.xlu0 %v455, 72
    %v464 = vpop.permute.xlu0 %463
    %v469 = vadd.f32 %v446, %v458
    %v470 = vadd.f32 %v447, %v460
    %v471 = vadd.f32 %v448, %v462
    %v472 = vadd.f32 %v449, %v464
    %vm473 = vcmask 851712
    %v474 = vsel %vm473, %v469, -inf
    %vm475 = vcmask 844544
    %v476 = vsel %vm475, %v470, -inf
    %v477 = vmax.f32 %v474, %v476
    %v478 = vrot.slane %v477, 4
    %v479 = vmax.f32 %v477, %v478
    %v480 = vrot.slane %v479, 2
    %v481 = vmax.f32 %v479, %v480
    %v482 = vrot.slane %v481, 1
    %v483 = vmax.f32 %v481, %v482
    %v484 = vsel %vm473, %v471, -inf
    %v485 = vsel %vm475, %v472, -inf
    %v486 = vmax.f32 %v484, %v485
    %v487 = vrot.slane %v486, 4
    %v488 = vmax.f32 %v486, %v487
    %v489 = vrot.slane %v488, 2
    %v490 = vmax.f32 %v488, %v489
    %v491 = vrot.slane %v490, 1
    %v492 = vmax.f32 %v490, %v491
    %v495 = vsel %vm226, %v492, %v483
    %496 = vrot.lane.b32.xlu0 %v495, 56
    %v497 = vpop.permute.xlu0 %496
    %vm499 = vcmask 255168
    %500 = vst.msk [vmem:[#allocation2] sm:$0x3] %vm499, %v497
    %v501 = vrot.slane %v156, 1
    %v502 = vrot.slane %v168, 1
    %503 = vrot.lane.b32.xlu0 %v501, 120
    %v504 = vpop.permute.xlu0 %503
    %505 = vrot.lane.b32.xlu0 %v502, 120
    %v506 = vpop.permute.xlu0 %505
    %v509 = vadd.f32 %v156, %v504
    %v510 = vadd.f32 %v168, %v506
    %v511 = vrot.slane %v156, 2
    %v512 = vrot.slane %v162, 2
    %v513 = vsel %vm231, %v511, %v512
    %v514 = vrot.slane %v168, 2
    %v515 = vrot.slane %v174, 2
    %v516 = vsel %vm231, %v514, %v515
    %517 = vrot.lane.b32.xlu0 %v513, 112
    %v518 = vpop.permute.xlu0 %517
    %519 = vrot.lane.b32.xlu0 %v516, 112
    %v520 = vpop.permute.xlu0 %519
    %v523 = vadd.f32 %v509, %v518
    %v524 = vadd.f32 %v510, %v520
    %v525 = vrot.slane %v156, 3
    %v526 = vrot.slane %v162, 3
    %v527 = vsel %vm254, %v525, %v526
    %v528 = vrot.slane %v168, 3
    %v529 = vrot.slane %v174, 3
    %v530 = vsel %vm254, %v528, %v529
    %531 = vrot.lane.b32.xlu0 %v527, 104
    %v532 = vpop.permute.xlu0 %531
    %533 = vrot.lane.b32.xlu0 %v530, 104
    %v534 = vpop.permute.xlu0 %533
    %v537 = vadd.f32 %v523, %v532
    %v538 = vadd.f32 %v524, %v534
    %v539 = vadd.f32 %v537, %v390
    %v540 = vadd.f32 %v538, %v394
    %v541 = vadd.f32 %v539, %v412
    %v542 = vadd.f32 %v540, %v416
    %v543 = vadd.f32 %v541, %v435
    %v544 = vadd.f32 %v542, %v439
    %v545 = vadd.f32 %v543, %v458
    %v546 = vadd.f32 %v544, %v462
    %547 = vrot.lane.b32.xlu0 %v162, 64
    %v548 = vpop.permute.xlu0 %547
    %549 = vrot.lane.b32.xlu0 %v174, 64
    %v550 = vpop.permute.xlu0 %549
    %v553 = vadd.f32 %v545, %v548
    %v554 = vadd.f32 %v546, %v550
    %v555 = vrot.slane %v162, 1
    %v556 = vrot.slane %v174, 1
    %557 = vrot.lane.b32.xlu0 %v555, 56
    %v558 = vpop.permute.xlu0 %557
    %559 = vrot.lane.b32.xlu0 %v556, 56
    %v560 = vpop.permute.xlu0 %559
    %v563 = vadd.f32 %v553, %v558
    %v564 = vadd.f32 %v554, %v560
    %vm565 = vcmask 325888
    %v566 = vsel %vm565, %v563, -inf
    %v567 = vrot.slane %v566, 4
    %v568 = vmax.f32 %v566, %v567
    %v569 = vrot.slane %v568, 2
    %v570 = vmax.f32 %v568, %v569
    %v571 = vrot.slane %v570, 1
    %v572 = vmax.f32 %v570, %v571
    %v573 = vsel %vm565, %v564, -inf
    %v574 = vrot.slane %v573, 4
    %v575 = vmax.f32 %v573, %v574
    %v576 = vrot.slane %v575, 2
    %v577 = vmax.f32 %v575, %v576
    %v578 = vrot.slane %v577, 1
    %v579 = vmax.f32 %v577, %v578
    %v582 = vsel %vm226, %v579, %v572
    %vm584 = vcmask 320768
    %585 = vst.msk [vmem:[#allocation2] sm:$0x3] %vm584, %v582
    %v586 = vld [vmem:[#allocation2] sm:$0x3]
    %v587 = vld [vmem:[%s2] sm:$0x1]
    %v589 = vlaneseq
    %v590 = vshrl.u32 %v589, 7
    %v591 = vsub.s32 0, %v590
    %v592 = vrot.slane %v587, %v591
    %v594 = vadd.f32 %v586, %v592
    %v595 = vmax.f32 %v594, 0.0
    %v596 = vld [vmem:[#allocation8] sm:$0xff]
    %v597 = vld [vmem:[#allocation8 + $0x8] sm:$0xff]
    %v598 = vld [vmem:[#allocation8 + $0x10] sm:$0xff]
    %v599 = vld [vmem:[#allocation8 + $0x18] sm:$0xff]
    %v600 = vld [vmem:[#allocation8 + $0x20] sm:$0xff]
    %v601 = vld [vmem:[#allocation8 + $0x28] sm:$0xff]
    %v602 = vld [vmem:[#allocation8 + $0x30] sm:$0xff]
    %v603 = vld [vmem:[#allocation8 + $0x38] sm:$0xff]
    %v604 = vld [vmem:[#allocation8 + $0x40] sm:$0xff]
    %v605 = vld [vmem:[#allocation8 + $0x48] sm:$0xff]
    %v606 = vld [vmem:[#allocation8 + $0x50] sm:$0xff]
    %v607 = vld [vmem:[#allocation8 + $0x58] sm:$0xff]
    %v608 = vld [vmem:[#allocation8 + $0x60] sm:$0xff]
    %v609 = vld [vmem:[#allocation8 + $0x68] sm:$0xff]
    %v610 = vld [vmem:[#allocation8 + $0x70] sm:$0xff]
    %v611 = vld [vmem:[#allocation8 + $0x78] sm:$0xff]
    %v612 = vld [vmem:[%s4] sm:$0x1]
    %v614 = vlaneseq
    %v615 = vshrl.u32 %v614, 7
    %v616 = vsub.s32 0, %v615
    %v617 = vrot.slane %v612, %v616
    %619 = vmatprep.subr.mxu0 0.0
    %620 = vmatpush1.msra.mxu0 %v611
    %621 = vmatprep.subr.mxu0 0.0
    %622 = vmatpush1.msra.mxu0 %v610
    %623 = vmatprep.subr.mxu0 0.0
    %624 = vmatpush1.msra.mxu0 %v609
    %625 = vmatprep.subr.mxu0 0.0
    %626 = vmatpush1.msra.mxu0 %v608
    %627 = vmatprep.subr.mxu0 0.0
    %628 = vmatpush1.msra.mxu0 %v607
    %629 = vmatprep.subr.mxu0 0.0
    %630 = vmatpush1.msra.mxu0 %v606
    %631 = vmatprep.subr.mxu0 0.0
    %632 = vmatpush1.msra.mxu0 %v605
    %633 = vmatprep.subr.mxu0 0.0
    %634 = vmatpush1.msra.mxu0 %v604
    %635 = vmatprep.subr.mxu0 0.0
    %636 = vmatpush1.msra.mxu0 %v603
    %637 = vmatprep.subr.mxu0 0.0
    %638 = vmatpush1.msra.mxu0 %v602
    %639 = vmatprep.subr.mxu0 0.0
    %640 = vmatpush1.msra.mxu0 %v601
    %641 = vmatprep.subr.mxu0 0.0
    %642 = vmatpush1.msra.mxu0 %v600
    %643 = vmatprep.subr.mxu0 0.0
    %644 = vmatpush1.msra.mxu0 %v599
    %645 = vmatprep.subr.mxu0 0.0
    %646 = vmatpush1.msra.mxu0 %v598
    %647 = vmatprep.subr.mxu0 0.0
    %648 = vmatpush1.msra.mxu0 %v597
    %649 = vmatprep.subr.mxu0 0.0
    %650 = vmatpush1.msra.mxu0 %v596
    %651 = vmatprep.subr.mxu0 0.0
    %652 = vmatpush2.msra.mxu0 0.0
    %653 = vmatprep.subr.mxu0 0.0
    %654 = vmatpush2.msra.mxu0 0.0
    %655 = vmatprep.subr.mxu0 0.0
    %656 = vmatpush2.msra.mxu0 0.0
    %657 = vmatprep.subr.mxu0 0.0
    %658 = vmatpush2.msra.mxu0 0.0
    %659 = vmatprep.subr.mxu0 0.0
    %660 = vmatpush2.msra.mxu0 0.0
    %661 = vmatprep.subr.mxu0 0.0
    %662 = vmatpush2.msra.mxu0 0.0
    %663 = vmatprep.subr.mxu0 0.0
    %664 = vmatpush2.msra.mxu0 0.0
    %665 = vmatprep.subr.mxu0 0.0
    %666 = vmatpush2.msra.mxu0 0.0
    %667 = vmatprep.subr.mxu0 0.0
    %668 = vmatpush2.msra.mxu0 0.0
    %669 = vmatprep.subr.mxu0 0.0
    %670 = vmatpush2.msra.mxu0 0.0
    %671 = vmatprep.subr.mxu0 0.0
    %672 = vmatpush2.msra.mxu0 0.0
    %673 = vmatprep.subr.mxu0 0.0
    %674 = vmatpush2.msra.mxu0 0.0
    %675 = vmatprep.subr.mxu0 0.0
    %676 = vmatpush2.msra.mxu0 0.0
    %677 = vmatprep.subr.mxu0 0.0
    %678 = vmatpush2.msra.mxu0 0.0
    %679 = vmatprep.subr.mxu0 0.0
    %680 = vmatpush2.msra.mxu0 0.0
    %681 = vmatprep.subr.mxu0 0.0
    %682 = vmatpush2.msra.mxu0 0.0
    %683 = vmatprep.mubr.f32.mxu0 0.0
    %684 = vmatmul.mubr.f32.gmra.mxu0 %v595
    %v685 = vpop.f32.mrf.mxu0
    %v686 = vadd.f32 %v617, %v685
    %v687 = vpop.f32.mrf.mxu0
    %688 = vdwg.mxu0
    %689 = vst [vmem:[#allocation9] sm:$0x3] %v686
    // Predicated region
    $region34: #{tpu_custom_call.1} parent=1 // pred_check
      _
    $region35: #{tpu_custom_call.1} parent=1 // pred_check_branch
      %691 = sbr.rel (0) target = $region37
    $region36: #{tpu_custom_call.1} parent=1 // pred_region
      %s693 = ssub.s32 32, 32
      %694 = vsyncadd [#allocation5], %s693
      %s696 = sshll.u32 [#allocation9], 4
      %s697 = int_to_ptr.vmem [resolvable:$true] %s696
      %699 = dma.vmem_to_hbm [thread:$0]  %s697, 32, %s5, [#allocation5]
    $region37: #{tpu_custom_call.1} parent=1 // pred_fallthru
      _
    // Predicated region
    $region38: #{tpu_custom_call.1} parent=1 // pred_check
      _
    $region39: #{tpu_custom_call.1} parent=1 // pred_check_branch
      %701 = sbr.rel (0) target = $region41
    $region40: #{tpu_custom_call.1} parent=1 // pred_region
      %702 = dma.done [#allocation5], 32
    $region41: #{tpu_custom_call.1} parent=1 // pred_fallthru
      _
    %703 = vsyncpa [#allocation4], 1
    %704 = vsyncpa [#allocation7], 1
    %705 = vsyncpa [#allocation5], 1

</llo_original>
